<compile_context>
chip_gen: v5e
topology: v5e:2x2
jax: 0.10.0
libtpu: 0.0.40
codegen_flags: <defaults>
</compile_context>

<pallas_src>
import functools
import math

import numpy as np

import jax
import jax.numpy as jnp
from jax import lax
from jax.experimental import pallas as pl
from jax.experimental.pallas import tpu as pltpu


def _round_up(x, m):
    return (x + m - 1) // m * m


def _vmem_capacity_bytes():
    """Physical VMEM per TensorCore (128 MiB v5e/v6e, 64 MiB v7x)."""
    try:
        return int(pltpu.get_tpu_info().vmem_capacity_bytes)
    except Exception:
        return 128 << 20


def _vmem_bytes(tile_m, tile_f, grid_f, d_p, itemsize, out_itemsize):
    """Rough VMEM footprint of one grid step, pipeline buffers included."""
    wbuf = 1 if grid_f == 1 else 2           # resident weights vs. F-streamed weights
    return (
        2 * tile_m * d_p * itemsize          # x tile (double-buffered over M)
        + 2 * tile_m * d_p * out_itemsize    # out tile (double-buffered over M)
        + wbuf * d_p * tile_f * itemsize     # w1 block(s)
        + wbuf * tile_f * d_p * itemsize     # w2 block(s)
        + wbuf * 8 * tile_f * 4              # b1 block(s), sublane-padded f32
        + 8 * d_p * 4                        # b2 (resident, single buffer)
        + tile_m * d_p * 4                   # f32 accumulator scratch
        + tile_m * tile_f * 4                # f32 hidden intermediate
    )


def _select_tiles(m, d_p, f_p, itemsize, out_itemsize, sub, budget):
    """Pick the largest (tile_m, tile_f) fitting the VMEM budget.

    Prefers full-F (weights resident) with the biggest M tile; halves the F
    tile only when the resident design does not fit (e.g. v7x / big models).
    """
    m_cap = _round_up(max(m, sub), sub)
    tm_cands = []
    for t in (2048, 1024, 512, 256, 128, 64, 32, 16, 8):
        if t % sub:
            continue
        t = min(t, m_cap)
        if t not in tm_cands:
            tm_cands.append(t)
    tf_cands = [f_p]
    tf = f_p
    while tf % 2 == 0 and (tf // 2) % 128 == 0:
        tf //= 2
        tf_cands.append(tf)
    for tile_f in tf_cands:
        grid_f = f_p // tile_f
        for tile_m in tm_cands:
            if _vmem_bytes(tile_m, tile_f, grid_f, d_p, itemsize, out_itemsize) <= budget:
                return tile_m, tile_f
    return tm_cands[-1], tf_cands[-1]


def _ffn_kernel(x_ref, w1_ref, b1_ref, w2_ref, b2_ref, o_ref, acc_ref, *,
                approximate_gelu):
    # x_ref: (tile_m, Dp); w1_ref: (Dp, tile_f); b1_ref: (1, tile_f);
    # w2_ref: (tile_f, Dp); b2_ref: (1, Dp); acc_ref: (tile_m, Dp) f32 scratch.
    f = pl.program_id(1)

    @pl.when(f == 0)
    def _():
        acc_ref[...] = jnp.zeros_like(acc_ref)

    # fc1 chunk: MXU inputs in the storage dtype (bf16 by default), f32 acc.
    h = jnp.dot(x_ref[...], w1_ref[...], preferred_element_type=jnp.float32)
    h = h + b1_ref[...]

    # GELU is elementwise in F, so F-tiling is exact.
    if approximate_gelu:
        h = jax.nn.gelu(h, approximate=True)                        # tanh -> EUP slot
    else:
        h = 0.5 * h * (1.0 + lax.erf(h * (1.0 / math.sqrt(2.0))))   # torch default

    # fc2 partial for this F chunk, accumulated in f32.
    acc_ref[...] += jnp.dot(h.astype(w2_ref.dtype), w2_ref[...],
                            preferred_element_type=jnp.float32)

    @pl.when(f == pl.num_programs(1) - 1)
    def _():
        # dropout: identity (eval/inference semantics).
        # TODO(synk): training-mode dropout via pltpu.prng_seed / prng_random_bits.
        o_ref[...] = (acc_ref[...] + b2_ref[...]).astype(o_ref.dtype)


def prepare_ffn_params(w1, b1, w2, b2, *, compute_dtype=jnp.bfloat16):
    """Pad feature dims to lane multiples (128) and cast the weights ONCE.

    Hoisted out of the per-call path so each forward pays no weight-sized
    pad/cast HBM traffic.  Biases stay f32.
    # TODO(synk): optional fp8 (v7x) / int8 (v5e/v6e) weight storage path.
    """
    D, F = w1.shape
    assert w2.shape == (F, D) and b1.shape == (F,) and b2.shape == (D,)
    cdt = jnp.dtype(compute_dtype)
    D_p, F_p = _round_up(D, 128), _round_up(F, 128)
    w1_p = w1.astype(cdt)
    w2_p = w2.astype(cdt)
    if (D_p, F_p) != (D, F):
        w1_p = jnp.pad(w1_p, ((0, D_p - D), (0, F_p - F)))
        w2_p = jnp.pad(w2_p, ((0, F_p - F), (0, D_p - D)))
    b1_p = jnp.pad(b1.astype(jnp.float32), (0, F_p - F)).reshape(1, F_p)
    b2_p = jnp.pad(b2.astype(jnp.float32), (0, D_p - D)).reshape(1, D_p)
    return dict(w1=w1_p, b1=b1_p, w2=w2_p, b2=b2_p, D=D, F=F)


def feed_forward_layer(x, params, *, tile_m=None, tile_f=None,
                       approximate_gelu=False, out_dtype=None):
    """x: (B, T, D); params from prepare_ffn_params.  Returns (B, T, D)."""
    B, T, D = x.shape
    assert D == params["D"], (D, params["D"])
    w1_p, b1_p, w2_p, b2_p = params["w1"], params["b1"], params["w2"], params["b2"]
    cdt = w1_p.dtype
    D_p, F_p = w1_p.shape
    M = B * T
    out_dtype = jnp.dtype(out_dtype) if out_dtype is not None else x.dtype

    itemsize = jnp.dtype(cdt).itemsize
    out_itemsize = jnp.dtype(out_dtype).itemsize
    sub = 16 if itemsize == 2 else 8

    vmem_cap = _vmem_capacity_bytes()
    budget = int(0.70 * vmem_cap)            # tile-selection headroom

    auto_m, auto_f = _select_tiles(M, D_p, F_p, itemsize, out_itemsize, sub, budget)
    tile_m = auto_m if tile_m is None else tile_m
    tile_f = auto_f if tile_f is None else tile_f
    tile_m = _round_up(min(tile_m, _round_up(M, sub)), sub)
    assert F_p % tile_f == 0, (F_p, tile_f)

    M_p = _round_up(M, tile_m)
    grid_m = M_p // tile_m
    grid_f = F_p // tile_f

    x2 = x.reshape(M, D).astype(cdt)
    if (M_p, D_p) != (M, D):
        x2 = jnp.pad(x2, ((0, M_p - M), (0, D_p - D)))

    vmem_needed = _vmem_bytes(tile_m, tile_f, grid_f, D_p, itemsize, out_itemsize)
    # Generation-aware cap: ~100 MiB on 128-MiB parts, ~50 MiB on v7x's 64 MiB.
    vmem_limit = int(min(max(int(1.25 * vmem_needed), 32 << 20), int(0.78 * vmem_cap)))

    w_reads = 1 if grid_f == 1 else grid_m   # weights re-streamed per M tile if F-tiled
    cost = pl.CostEstimate(
        flops=int(4 * M_p * D_p * F_p),                  # fc1 + fc2
        transcendentals=int(M_p * F_p),                   # erf/tanh over the hidden tile
        bytes_accessed=int(
            x2.size * itemsize
            + w_reads * (w1_p.size + w2_p.size) * itemsize
            + (b1_p.size + b2_p.size) * 4
            + M_p * D_p * out_itemsize),
    )

    kernel = functools.partial(_ffn_kernel, approximate_gelu=approximate_gelu)

    def call(use_single_buffering):
        if use_single_buffering:
            res_kw = dict(pipeline_mode=pl.Buffered(1))     # constant index_map -> 1 buffer
            w_kw = res_kw if grid_f == 1 else {}
        else:
            res_kw, w_kw = {}, {}
        in_specs = [
            pl.BlockSpec((tile_m, D_p), lambda i, f: (i, 0)),            # x: M-streamed
            pl.BlockSpec((D_p, tile_f), lambda i, f: (0, f), **w_kw),    # w1
            pl.BlockSpec((1, tile_f), lambda i, f: (0, f), **w_kw),      # b1
            pl.BlockSpec((tile_f, D_p), lambda i, f: (f, 0), **w_kw),    # w2
            pl.BlockSpec((1, D_p), lambda i, f: (0, 0), **res_kw),       # b2: resident
        ]
        return pl.pallas_call(
            kernel,
            out_shape=jax.ShapeDtypeStruct((M_p, D_p), out_dtype),
            grid=(grid_m, grid_f),
            in_specs=in_specs,
            out_specs=pl.BlockSpec((tile_m, D_p), lambda i, f: (i, 0)),
            scratch_shapes=[pltpu.VMEM((tile_m, D_p), jnp.float32)],
            compiler_params=pltpu.CompilerParams(
                dimension_semantics=("parallel", "arbitrary"),
                vmem_limit_bytes=vmem_limit,
            ),
            cost_estimate=cost,
        )(x2, w1_p, b1_p, w2_p, b2_p)

    try:
        out_p = call(True)
    except Exception:
        # TODO(synk): drop fallback once pl.Buffered(1) is supported everywhere.
        out_p = call(False)

    if (M_p, D_p) != (M, D):
        out_p = out_p[:M, :D]
    return out_p.reshape(B, T, D)


def init_params(key, input_dim, feedforward_dim):
    """torch.nn.Linear-style init (uniform ±1/sqrt(fan_in)), weights as (in, out)."""
    k1, k2, k3, k4 = jax.random.split(key, 4)
    bound1 = 1.0 / math.sqrt(input_dim)
    bound2 = 1.0 / math.sqrt(feedforward_dim)
    w1 = jax.random.uniform(k1, (input_dim, feedforward_dim), jnp.float32,
                            minval=-bound1, maxval=bound1)
    b1 = jax.random.uniform(k2, (feedforward_dim,), jnp.float32,
                            minval=-bound1, maxval=bound1)
    w2 = jax.random.uniform(k3, (feedforward_dim, input_dim), jnp.float32,
                            minval=-bound2, maxval=bound2)
    b2 = jax.random.uniform(k4, (input_dim,), jnp.float32,
                            minval=-bound2, maxval=bound2)
    return w1, b1, w2, b2


def _numpy_reference(x, w1, b1, w2, b2):
    """High-precision host reference of the torch eval forward (erf GELU, dropout=id)."""
    xn = np.asarray(x, np.float64)
    D = xn.shape[-1]
    h = xn.reshape(-1, D) @ np.asarray(w1, np.float64) + np.asarray(b1, np.float64)
    h = 0.5 * h * (1.0 + np.vectorize(math.erf)(h / math.sqrt(2.0)))
    y = h @ np.asarray(w2, np.float64) + np.asarray(b2, np.float64)
    return y.reshape(xn.shape).astype(np.float32)


if __name__ == "__main__":
    batch, num_tokens, token_dim = 2, 8, 32
    feedforward_dim = token_dim * 4  # module default: input_dim * 4 -> 128

    key = jax.random.PRNGKey(0)
    kx, kp = jax.random.split(key)
    x = jax.random.normal(kx, (batch, num_tokens, token_dim), jnp.float32)
    w1, b1, w2, b2 = init_params(kp, token_dim, feedforward_dim)

    y_ref = _numpy_reference(x, w1, b1, w2, b2)

    # 1) f32 MXU-input path (numerics-parity mode).
    params_f32 = prepare_ffn_params(w1, b1, w2, b2, compute_dtype=jnp.float32)
    out_f32 = jax.block_until_ready(feed_forward_layer(x, params_f32))
    assert out_f32.shape == (batch, num_tokens, token_dim)
    assert float(np.max(np.abs(np.asarray(out_f32) - y_ref))) < 2e-2

    # 2) default bf16 MXU inputs / f32 accumulation (perf mode) — loose tolerance.
    params_bf16 = prepare_ffn_params(w1, b1, w2, b2)  # compute_dtype=bf16 by default
    out_bf16 = jax.block_until_ready(feed_forward_layer(x, params_bf16))
    assert out_bf16.shape == (batch, num_tokens, token_dim)
    assert float(np.max(np.abs(np.asarray(out_bf16) - y_ref))) < 1.5e-1

    # 3) exercise the F-tiled accumulate path (grid_f > 1) with a wider hidden dim.
    ff2 = 256
    w1b, b1b, w2b, b2b = init_params(jax.random.PRNGKey(1), token_dim, ff2)
    y2_ref = _numpy_reference(x, w1b, b1b, w2b, b2b)
    params2 = prepare_ffn_params(w1b, b1b, w2b, b2b, compute_dtype=jnp.float32)
    out2 = jax.block_until_ready(feed_forward_layer(x, params2, tile_f=128))
    assert out2.shape == (batch, num_tokens, token_dim)
    assert float(np.max(np.abs(np.asarray(out2) - y2_ref))) < 2e-2

    print("KERNEL_OK")
</pallas_src>

<mosaic_0001>
module attributes {stable_mosaic.version = 11 : i64} {
  func.func @_ffn_kernel(%arg0: i32, %arg1: i32, %arg2: memref<16x128xf32, #tpu.memory_space<vmem>>, %arg3: memref<128x128xf32, #tpu.memory_space<vmem>>, %arg4: memref<1x128xf32, #tpu.memory_space<vmem>>, %arg5: memref<128x128xf32, #tpu.memory_space<vmem>>, %arg6: memref<1x128xf32, #tpu.memory_space<vmem>>, %arg7: memref<16x128xf32, #tpu.memory_space<vmem>>, %arg8: memref<16x128xf32, #tpu.memory_space<vmem>>) attributes {dimension_semantics = [#tpu.dimension_semantics<parallel>, #tpu.dimension_semantics<arbitrary>], iteration_bounds = array<i64: 1, 1>, scalar_prefetch = 0 : i64, scratch_operands = 1 : i64, tpu.core_type = #tpu.core_type<tc>, window_params = [{transform_indices = @transform_0, window_bounds = array<i64: 16, 128>}, {pipeline_mode = #tpu.pipeline_mode<synchronous>, transform_indices = @transform_1, window_bounds = array<i64: 128, 128>}, {pipeline_mode = #tpu.pipeline_mode<synchronous>, transform_indices = @transform_2, window_bounds = array<i64: 1, 128>}, {pipeline_mode = #tpu.pipeline_mode<synchronous>, transform_indices = @transform_3, window_bounds = array<i64: 128, 128>}, {pipeline_mode = #tpu.pipeline_mode<synchronous>, transform_indices = @transform_4, window_bounds = array<i64: 1, 128>}, {transform_indices = @transform_5, window_bounds = array<i64: 16, 128>}]} {
    %c0_i32 = arith.constant 0 : i32
    %0 = arith.cmpi eq, %arg1, %c0_i32 : i32
    %1 = arith.extui %0 : i1 to i32
    %c0_i32_0 = arith.constant 0 : i32
    %2 = arith.cmpi ne, %1, %c0_i32_0 : i32
    scf.if %2 {
      %cst_18 = arith.constant 0.000000e+00 : f32
      %25 = vector.broadcast %cst_18 : f32 to vector<16x128xf32>
      %c0_19 = arith.constant 0 : index
      %c0_20 = arith.constant 0 : index
      %26 = vector.load %arg8[%c0_19, %c0_20] : memref<16x128xf32, #tpu.memory_space<vmem>>, vector<16x128xf32>
      tpu.vector_store %arg8[%c0_19, %c0_20], %25 {strides = array<i32>} : memref<16x128xf32, #tpu.memory_space<vmem>>, vector<16x128xf32>,
    } else {
    }
    %c0 = arith.constant 0 : index
    %c0_1 = arith.constant 0 : index
    %3 = vector.load %arg2[%c0, %c0_1] : memref<16x128xf32, #tpu.memory_space<vmem>>, vector<16x128xf32>
    %c0_2 = arith.constant 0 : index
    %c0_3 = arith.constant 0 : index
    %4 = vector.load %arg3[%c0_2, %c0_3] : memref<128x128xf32, #tpu.memory_space<vmem>>, vector<128x128xf32>
    %cst = arith.constant dense<0.000000e+00> : vector<16x128xf32>
    %5 = tpu.matmul %3, %4, %cst {dimension_numbers = #tpu.dot_dimension_numbers<[1], [0], [0], [1], [0, 0, 1, 1], [], []>} : vector<16x128xf32>, vector<128x128xf32>, vector<16x128xf32> -> vector<16x128xf32>
    %c0_4 = arith.constant 0 : index
    %c0_5 = arith.constant 0 : index
    %6 = vector.load %arg4[%c0_4, %c0_5] : memref<1x128xf32, #tpu.memory_space<vmem>>, vector<1x128xf32>
    %7 = vector.broadcast %6 : vector<1x128xf32> to vector<16x128xf32>
    %8 = arith.addf %5, %7 : vector<16x128xf32>
    %cst_6 = arith.constant 5.000000e-01 : f32
    %9 = vector.broadcast %cst_6 : f32 to vector<16x128xf32>
    %10 = arith.mulf %9, %8 : vector<16x128xf32>
    %cst_7 = arith.constant 0.707106769 : f32
    %11 = vector.broadcast %cst_7 : f32 to vector<16x128xf32>
    %12 = arith.mulf %8, %11 : vector<16x128xf32>
    %13 = math.erf %12 : vector<16x128xf32>
    %cst_8 = arith.constant 1.000000e+00 : f32
    %14 = vector.broadcast %cst_8 : f32 to vector<16x128xf32>
    %15 = arith.addf %14, %13 : vector<16x128xf32>
    %16 = arith.mulf %10, %15 : vector<16x128xf32>
    %c0_9 = arith.constant 0 : index
    %c0_10 = arith.constant 0 : index
    %17 = vector.load %arg8[%c0_9, %c0_10] : memref<16x128xf32, #tpu.memory_space<vmem>>, vector<16x128xf32>
    %c0_11 = arith.constant 0 : index
    %c0_12 = arith.constant 0 : index
    %18 = vector.load %arg5[%c0_11, %c0_12] : memref<128x128xf32, #tpu.memory_space<vmem>>, vector<128x128xf32>
    %cst_13 = arith.constant dense<0.000000e+00> : vector<16x128xf32>
    %19 = tpu.matmul %16, %18, %cst_13 {dimension_numbers = #tpu.dot_dimension_numbers<[1], [0], [0], [1], [0, 0, 1, 1], [], []>} : vector<16x128xf32>, vector<128x128xf32>, vector<16x128xf32> -> vector<16x128xf32>
    %20 = arith.addf %17, %19 : vector<16x128xf32>
    %c0_14 = arith.constant 0 : index
    %c0_15 = arith.constant 0 : index
    %21 = vector.load %arg8[%c0_14, %c0_15] : memref<16x128xf32, #tpu.memory_space<vmem>>, vector<16x128xf32>
    tpu.vector_store %arg8[%c0_14, %c0_15], %20 {strides = array<i32>} : memref<16x128xf32, #tpu.memory_space<vmem>>, vector<16x128xf32>,
    %c0_i32_16 = arith.constant 0 : i32
    %22 = arith.cmpi eq, %arg1, %c0_i32_16 : i32
    %23 = arith.extui %22 : i1 to i32
    %c0_i32_17 = arith.constant 0 : i32
    %24 = arith.cmpi ne, %23, %c0_i32_17 : i32
    scf.if %24 {
      %c0_18 = arith.constant 0 : index
      %c0_19 = arith.constant 0 : index
      %25 = vector.load %arg8[%c0_18, %c0_19] : memref<16x128xf32, #tpu.memory_space<vmem>>, vector<16x128xf32>
      %c0_20 = arith.constant 0 : index
      %c0_21 = arith.constant 0 : index
      %26 = vector.load %arg6[%c0_20, %c0_21] : memref<1x128xf32, #tpu.memory_space<vmem>>, vector<1x128xf32>
      %27 = vector.broadcast %26 : vector<1x128xf32> to vector<16x128xf32>
      %28 = arith.addf %25, %27 : vector<16x128xf32>
      %c0_22 = arith.constant 0 : index
      %c0_23 = arith.constant 0 : index
      %29 = vector.load %arg7[%c0_22, %c0_23] : memref<16x128xf32, #tpu.memory_space<vmem>>, vector<16x128xf32>
      tpu.vector_store %arg7[%c0_22, %c0_23], %28 {strides = array<i32>} : memref<16x128xf32, #tpu.memory_space<vmem>>, vector<16x128xf32>,
    } else {
    }
    return
  }
  func.func @transform_0(%arg0: i32, %arg1: i32) -> (i32, i32) {
    %c0_i32 = arith.constant 0 : i32
    %c0_i32_0 = arith.constant 0 : i32
    return %arg0, %c0_i32 : i32, i32
  }
  func.func @transform_1(%arg0: i32, %arg1: i32) -> (i32, i32) {
    %c0_i32 = arith.constant 0 : i32
    %c0_i32_0 = arith.constant 0 : i32
    return %c0_i32, %arg1 : i32, i32
  }
  func.func @transform_2(%arg0: i32, %arg1: i32) -> (i32, i32) {
    %c0_i32 = arith.constant 0 : i32
    %c0_i32_0 = arith.constant 0 : i32
    return %c0_i32, %arg1 : i32, i32
  }
  func.func @transform_3(%arg0: i32, %arg1: i32) -> (i32, i32) {
    %c0_i32 = arith.constant 0 : i32
    %c0_i32_0 = arith.constant 0 : i32
    return %arg1, %c0_i32 : i32, i32
  }
  func.func @transform_4(%arg0: i32, %arg1: i32) -> (i32, i32) {
    %c0_i32 = arith.constant 0 : i32
    %c0_i32_0 = arith.constant 0 : i32
    %c0_i32_1 = arith.constant 0 : i32
    return %c0_i32, %c0_i32_0 : i32, i32
  }
  func.func @transform_5(%arg0: i32, %arg1: i32) -> (i32, i32) {
    %c0_i32 = arith.constant 0 : i32
    %c0_i32_0 = arith.constant 0 : i32
    return %arg0, %c0_i32 : i32, i32
  }
}

module attributes {stable_mosaic.version = 11 : i64} {
  func.func @_ffn_kernel(%arg0: i32, %arg1: i32, %arg2: memref<16x128xf32, #tpu.memory_space<vmem>>, %arg3: memref<128x128xf32, #tpu.memory_space<vmem>>, %arg4: memref<1x128xf32, #tpu.memory_space<vmem>>, %arg5: memref<128x128xf32, #tpu.memory_space<vmem>>, %arg6: memref<1x128xf32, #tpu.memory_space<vmem>>, %arg7: memref<16x128xf32, #tpu.memory_space<vmem>>, %arg8: memref<16x128xf32, #tpu.memory_space<vmem>>) attributes {dimension_semantics = [#tpu.dimension_semantics<parallel>, #tpu.dimension_semantics<arbitrary>], iteration_bounds = array<i64: 1, 1>, scalar_prefetch = 0 : i64, scratch_operands = 1 : i64, tpu.core_type = #tpu.core_type<tc>, window_params = [{transform_indices = @transform_0, window_bounds = array<i64: 16, 128>}, {transform_indices = @transform_1, window_bounds = array<i64: 128, 128>}, {transform_indices = @transform_2, window_bounds = array<i64: 1, 128>}, {transform_indices = @transform_3, window_bounds = array<i64: 128, 128>}, {pipeline_mode = #tpu.pipeline_mode<synchronous>, transform_indices = @transform_4, window_bounds = array<i64: 1, 128>}, {transform_indices = @transform_5, window_bounds = array<i64: 16, 128>}]} {
    %c0_i32 = arith.constant 0 : i32
    %0 = arith.cmpi eq, %arg1, %c0_i32 : i32
    %1 = arith.extui %0 : i1 to i32
    %c0_i32_0 = arith.constant 0 : i32
    %2 = arith.cmpi ne, %1, %c0_i32_0 : i32
    scf.if %2 {
      %cst_18 = arith.constant 0.000000e+00 : f32
      %25 = vector.broadcast %cst_18 : f32 to vector<16x128xf32>
      %c0_19 = arith.constant 0 : index
      %c0_20 = arith.constant 0 : index
      %26 = vector.load %arg8[%c0_19, %c0_20] : memref<16x128xf32, #tpu.memory_space<vmem>>, vector<16x128xf32>
      tpu.vector_store %arg8[%c0_19, %c0_20], %25 {strides = array<i32>} : memref<16x128xf32, #tpu.memory_space<vmem>>, vector<16x128xf32>,
    } else {
    }
    %c0 = arith.constant 0 : index
    %c0_1 = arith.constant 0 : index
    %3 = vector.load %arg2[%c0, %c0_1] : memref<16x128xf32, #tpu.memory_space<vmem>>, vector<16x128xf32>
    %c0_2 = arith.constant 0 : index
    %c0_3 = arith.constant 0 : index
    %4 = vector.load %arg3[%c0_2, %c0_3] : memref<128x128xf32, #tpu.memory_space<vmem>>, vector<128x128xf32>
    %cst = arith.constant dense<0.000000e+00> : vector<16x128xf32>
    %5 = tpu.matmul %3, %4, %cst {dimension_numbers = #tpu.dot_dimension_numbers<[1], [0], [0], [1], [0, 0, 1, 1], [], []>} : vector<16x128xf32>, vector<128x128xf32>, vector<16x128xf32> -> vector<16x128xf32>
    %c0_4 = arith.constant 0 : index
    %c0_5 = arith.constant 0 : index
    %6 = vector.load %arg4[%c0_4, %c0_5] : memref<1x128xf32, #tpu.memory_space<vmem>>, vector<1x128xf32>
    %7 = vector.broadcast %6 : vector<1x128xf32> to vector<16x128xf32>
    %8 = arith.addf %5, %7 : vector<16x128xf32>
    %cst_6 = arith.constant 5.000000e-01 : f32
    %9 = vector.broadcast %cst_6 : f32 to vector<16x128xf32>
    %10 = arith.mulf %9, %8 : vector<16x128xf32>
    %cst_7 = arith.constant 0.707106769 : f32
    %11 = vector.broadcast %cst_7 : f32 to vector<16x128xf32>
    %12 = arith.mulf %8, %11 : vector<16x128xf32>
    %13 = math.erf %12 : vector<16x128xf32>
    %cst_8 = arith.constant 1.000000e+00 : f32
    %14 = vector.broadcast %cst_8 : f32 to vector<16x128xf32>
    %15 = arith.addf %14, %13 : vector<16x128xf32>
    %16 = arith.mulf %10, %15 : vector<16x128xf32>
    %c0_9 = arith.constant 0 : index
    %c0_10 = arith.constant 0 : index
    %17 = vector.load %arg8[%c0_9, %c0_10] : memref<16x128xf32, #tpu.memory_space<vmem>>, vector<16x128xf32>
    %c0_11 = arith.constant 0 : index
    %c0_12 = arith.constant 0 : index
    %18 = vector.load %arg5[%c0_11, %c0_12] : memref<128x128xf32, #tpu.memory_space<vmem>>, vector<128x128xf32>
    %cst_13 = arith.constant dense<0.000000e+00> : vector<16x128xf32>
    %19 = tpu.matmul %16, %18, %cst_13 {dimension_numbers = #tpu.dot_dimension_numbers<[1], [0], [0], [1], [0, 0, 1, 1], [], []>} : vector<16x128xf32>, vector<128x128xf32>, vector<16x128xf32> -> vector<16x128xf32>
    %20 = arith.addf %17, %19 : vector<16x128xf32>
    %c0_14 = arith.constant 0 : index
    %c0_15 = arith.constant 0 : index
    %21 = vector.load %arg8[%c0_14, %c0_15] : memref<16x128xf32, #tpu.memory_space<vmem>>, vector<16x128xf32>
    tpu.vector_store %arg8[%c0_14, %c0_15], %20 {strides = array<i32>} : memref<16x128xf32, #tpu.memory_space<vmem>>, vector<16x128xf32>,
    %c0_i32_16 = arith.constant 0 : i32
    %22 = arith.cmpi eq, %arg1, %c0_i32_16 : i32
    %23 = arith.extui %22 : i1 to i32
    %c0_i32_17 = arith.constant 0 : i32
    %24 = arith.cmpi ne, %23, %c0_i32_17 : i32
    scf.if %24 {
      %c0_18 = arith.constant 0 : index
      %c0_19 = arith.constant 0 : index
      %25 = vector.load %arg8[%c0_18, %c0_19] : memref<16x128xf32, #tpu.memory_space<vmem>>, vector<16x128xf32>
      %c0_20 = arith.constant 0 : index
      %c0_21 = arith.constant 0 : index
      %26 = vector.load %arg6[%c0_20, %c0_21] : memref<1x128xf32, #tpu.memory_space<vmem>>, vector<1x128xf32>
      %27 = vector.broadcast %26 : vector<1x128xf32> to vector<16x128xf32>
      %28 = arith.addf %25, %27 : vector<16x128xf32>
      %c0_22 = arith.constant 0 : index
      %c0_23 = arith.constant 0 : index
      %29 = vector.load %arg7[%c0_22, %c0_23] : memref<16x128xf32, #tpu.memory_space<vmem>>, vector<16x128xf32>
      tpu.vector_store %arg7[%c0_22, %c0_23], %28 {strides = array<i32>} : memref<16x128xf32, #tpu.memory_space<vmem>>, vector<16x128xf32>,
    } else {
    }
    return
  }
  func.func @transform_0(%arg0: i32, %arg1: i32) -> (i32, i32) {
    %c0_i32 = arith.constant 0 : i32
    %c0_i32_0 = arith.constant 0 : i32
    return %arg0, %c0_i32 : i32, i32
  }
  func.func @transform_1(%arg0: i32, %arg1: i32) -> (i32, i32) {
    %c0_i32 = arith.constant 0 : i32
    %c0_i32_0 = arith.constant 0 : i32
    return %c0_i32, %arg1 : i32, i32
  }
  func.func @transform_2(%arg0: i32, %arg1: i32) -> (i32, i32) {
    %c0_i32 = arith.constant 0 : i32
    %c0_i32_0 = arith.constant 0 : i32
    return %c0_i32, %arg1 : i32, i32
  }
  func.func @transform_3(%arg0: i32, %arg1: i32) -> (i32, i32) {
    %c0_i32 = arith.constant 0 : i32
    %c0_i32_0 = arith.constant 0 : i32
    return %arg1, %c0_i32 : i32, i32
  }
  func.func @transform_4(%arg0: i32, %arg1: i32) -> (i32, i32) {
    %c0_i32 = arith.constant 0 : i32
    %c0_i32_0 = arith.constant 0 : i32
    %c0_i32_1 = arith.constant 0 : i32
    return %c0_i32, %c0_i32_0 : i32, i32
  }
  func.func @transform_5(%arg0: i32, %arg1: i32) -> (i32, i32) {
    %c0_i32 = arith.constant 0 : i32
    %c0_i32_0 = arith.constant 0 : i32
    return %arg0, %c0_i32 : i32, i32
  }
}

</mosaic_0001>

<llo_original>
// kernel: tpu_custom_call.1
$region0: #{tpu_custom_call.1}
  #allocation0 [shape = 'u32[]', space=smem, size = 0x4, offset = 0x4, fixed_abs, tag = 'smem constant byte address 0x4 - core index']
  #allocation1 [shape = 'u32[72,128]{1,0:T(1,128)}', space=vmem, size = 0x9000, scoped, tag = 'internal scratch']
  #allocation2 [shape = 'f32[16,128]{1,0:T(8,128)}', space=vmem, size = 0x2000, scoped, tag = 'scratch operand']
  %s0 = inlined_call_operand.hbm [shape: f32[16,128], index: 0, kind: input, shape index: {}]
  %s1 = inlined_call_operand.hbm [shape: f32[128,128], index: 1, kind: input, shape index: {}]
  %s2 = inlined_call_operand.vmem [shape: f32[1,128], index: 2, kind: input, shape index: {}]
  %s3 = inlined_call_operand.hbm [shape: f32[128,128], index: 3, kind: input, shape index: {}]
  %s4 = inlined_call_operand.vmem [shape: f32[1,128], index: 4, kind: input, shape index: {}]
  %s5 = inlined_call_operand.hbm [shape: f32[16,128], index: 5, kind: output, shape index: {}]
  %s6 = sld [smem:[#allocation0]]
  $region50: #{tpu_custom_call.1} parent=0
    _
  %s8 = ssub.s32 1, %s6
  %s9 = scalar_select 0, %s8, %s6
  $region1: #{tpu_custom_call.1} parent=0
    #allocation3 [shape = 'u8[8192]{0}', space=vmem, size = 0x2000, scoped, tag = 'input window, operand 0, single buffered']
    #allocation4 [shape = 's32[1]{0}', space=sflag, size = 0x4, scoped, tag = 'scoped memory for tpu_custom_call.1']
    #allocation5 [shape = 's32[1]{0}', space=sflag, size = 0x4, scoped, tag = 'scoped memory for tpu_custom_call.1']
    #allocation6 [shape = 'u8[65536]{0}', space=vmem, size = 0x10000, scoped, tag = 'input window, operand 1, single buffered']
    #allocation7 [shape = 's32[1]{0}', space=sflag, size = 0x4, scoped, tag = 'scoped memory for tpu_custom_call.1']
    #allocation8 [shape = 'u8[65536]{0}', space=vmem, size = 0x10000, scoped, tag = 'input window, operand 3, single buffered']
    #allocation9 [shape = 'u8[8192]{0}', space=vmem, size = 0x2000, scoped, tag = 'output window, operand 0, single buffered']
    %10 = vsyncpa [#allocation4], 0
    %11 = vsyncpa [#allocation7], 0
    %12 = vsyncpa [#allocation5], 0
    // Predicated region
    $region2: #{tpu_custom_call.1} parent=1 // pred_check
      _
    $region3: #{tpu_custom_call.1} parent=1 // pred_check_branch
      %14 = sbr.rel (0) target = $region5
    $region4: #{tpu_custom_call.1} parent=1 // pred_region
      %16 = vsyncadd [#allocation4], 0
      %s17 = sshll.u32 %s0, 4
      %s18 = int_to_ptr.hbm [resolvable:$true] %s17
      %s19 = sshll.u32 [#allocation3], 4
      %s20 = int_to_ptr.vmem [resolvable:$true] %s19
      %25 = dma.hbm_to_vmem [thread:$0]  %s18, 256, %s20, [#allocation4], 128, 128, 8
    $region5: #{tpu_custom_call.1} parent=1 // pred_fallthru
      _
    // Predicated region
    $region6: #{tpu_custom_call.1} parent=1 // pred_check
      _
    $region7: #{tpu_custom_call.1} parent=1 // pred_check_branch
      %27 = sbr.rel (0) target = $region9
    $region8: #{tpu_custom_call.1} parent=1 // pred_region
      %29 = vsyncadd [#allocation7], 0
      %s30 = sshll.u32 %s1, 4
      %s31 = int_to_ptr.hbm [resolvable:$true] %s30
      %s32 = sshll.u32 [#allocation6], 4
      %s33 = int_to_ptr.vmem [resolvable:$true] %s32
      %38 = dma.hbm_to_vmem [thread:$0]  %s31, 2048, %s33, [#allocation7], 128, 128, 8
    $region9: #{tpu_custom_call.1} parent=1 // pred_fallthru
      _
    // Predicated region
    $region10: #{tpu_custom_call.1} parent=1 // pred_check
      _
    $region11: #{tpu_custom_call.1} parent=1 // pred_check_branch
      %40 = sbr.rel (0) target = $region13
    $region12: #{tpu_custom_call.1} parent=1 // pred_region
      _
    $region13: #{tpu_custom_call.1} parent=1 // pred_fallthru
      _
    // Predicated region
    $region14: #{tpu_custom_call.1} parent=1 // pred_check
      _
    $region15: #{tpu_custom_call.1} parent=1 // pred_check_branch
      %42 = sbr.rel (0) target = $region17
    $region16: #{tpu_custom_call.1} parent=1 // pred_region
      %44 = vsyncadd [#allocation7], 0
      %s45 = sshll.u32 %s3, 4
      %s46 = int_to_ptr.hbm [resolvable:$true] %s45
      %s47 = sshll.u32 [#allocation8], 4
      %s48 = int_to_ptr.vmem [resolvable:$true] %s47
      %53 = dma.hbm_to_vmem [thread:$0]  %s46, 2048, %s48, [#allocation7], 128, 128, 8
    $region17: #{tpu_custom_call.1} parent=1 // pred_fallthru
      _
    // Predicated region
    $region18: #{tpu_custom_call.1} parent=1 // pred_check
      _
    $region19: #{tpu_custom_call.1} parent=1 // pred_check_branch
      %55 = sbr.rel (0) target = $region21
    $region20: #{tpu_custom_call.1} parent=1 // pred_region
      _
    $region21: #{tpu_custom_call.1} parent=1 // pred_fallthru
      _
    // Predicated region
    $region22: #{tpu_custom_call.1} parent=1 // pred_check
      _
    $region23: #{tpu_custom_call.1} parent=1 // pred_check_branch
      %57 = sbr.rel (0) target = $region25
    $region24: #{tpu_custom_call.1} parent=1 // pred_region
      %59 = dma.done [#allocation4], 256
    $region25: #{tpu_custom_call.1} parent=1 // pred_fallthru
      _
    // Predicated region
    $region26: #{tpu_custom_call.1} parent=1 // pred_check
      _
    $region27: #{tpu_custom_call.1} parent=1 // pred_check_branch
      %61 = sbr.rel (0) target = $region29
    $region28: #{tpu_custom_call.1} parent=1 // pred_region
      %63 = dma.done [#allocation7], 2048
    $region29: #{tpu_custom_call.1} parent=1 // pred_fallthru
      _
    // Predicated region
    $region30: #{tpu_custom_call.1} parent=1 // pred_check
      _
    $region31: #{tpu_custom_call.1} parent=1 // pred_check_branch
      %65 = sbr.rel (0) target = $region33
    $region32: #{tpu_custom_call.1} parent=1 // pred_region
      %67 = dma.done [#allocation7], 2048
    $region33: #{tpu_custom_call.1} parent=1 // pred_fallthru
      _
    %p68 = scmp.eq.s32.totalorder 0, 0
    // Predicated region
    $region34: #{tpu_custom_call.1} parent=1 // pred_check
      %p69 = pneg %p68
    $region35: #{tpu_custom_call.1} parent=1 // pred_check_branch
      %71 = sbr.rel (%p69) target = $region37
    $region36: #{tpu_custom_call.1} parent=1 // pred_region
      %72 = vst [vmem:[#allocation2] sm:$0xff] 0.0
      %73 = vst [vmem:[#allocation2 + $0x8] sm:$0xff] 0.0
    $region37: #{tpu_custom_call.1} parent=1 // pred_fallthru
      _
    %v74 = vld [vmem:[#allocation3] sm:$0xff]
    %v75 = vld [vmem:[#allocation3 + $0x8] sm:$0xff]
    %v76 = vld [vmem:[#allocation6] sm:$0xff]
    %v77 = vld [vmem:[#allocation6 + $0x8] sm:$0xff]
    %v78 = vld [vmem:[#allocation6 + $0x10] sm:$0xff]
    %v79 = vld [vmem:[#allocation6 + $0x18] sm:$0xff]
    %v80 = vld [vmem:[#allocation6 + $0x20] sm:$0xff]
    %v81 = vld [vmem:[#allocation6 + $0x28] sm:$0xff]
    %v82 = vld [vmem:[#allocation6 + $0x30] sm:$0xff]
    %v83 = vld [vmem:[#allocation6 + $0x38] sm:$0xff]
    %v84 = vld [vmem:[#allocation6 + $0x40] sm:$0xff]
    %v85 = vld [vmem:[#allocation6 + $0x48] sm:$0xff]
    %v86 = vld [vmem:[#allocation6 + $0x50] sm:$0xff]
    %v87 = vld [vmem:[#allocation6 + $0x58] sm:$0xff]
    %v88 = vld [vmem:[#allocation6 + $0x60] sm:$0xff]
    %v89 = vld [vmem:[#allocation6 + $0x68] sm:$0xff]
    %v90 = vld [vmem:[#allocation6 + $0x70] sm:$0xff]
    %v91 = vld [vmem:[#allocation6 + $0x78] sm:$0xff]
    %v92 = vld [vmem:[%s2] sm:$0x1]
    %v94 = vperm.slane %v92, 0
    %96 = vmatpush.msra.mxu0 %v91
    %97 = vmatpush.msra.mxu0 %v90
    %98 = vmatpush.msra.mxu0 %v89
    %99 = vmatpush.msra.mxu0 %v88
    %100 = vmatpush.msra.mxu0 %v87
    %101 = vmatpush.msra.mxu0 %v86
    %102 = vmatpush.msra.mxu0 %v85
    %103 = vmatpush.msra.mxu0 %v84
    %104 = vmatpush.msra.mxu0 %v83
    %105 = vmatpush.msra.mxu0 %v82
    %106 = vmatpush.msra.mxu0 %v81
    %107 = vmatpush.msra.mxu0 %v80
    %108 = vmatpush.msra.mxu0 %v79
    %109 = vmatpush.msra.mxu0 %v78
    %110 = vmatpush.msra.mxu0 %v77
    %111 = vmatpush.msra.mxu0 %v76
    %112 = vmatmul.f32.gmra.mxu0 %v74
    %v113 = vpop.f32.mrf.mxu0
    %v114 = vadd.f32 %v94, %v113
    %115 = vmatmul.f32.gmra.mxu0 %v75
    %v116 = vpop.f32.mrf.mxu0
    %v117 = vadd.f32 %v94, %v116
    %118 = vdwg.mxu0
    %v119 = vmul.f32 %v114, 0.5
    %v120 = vmul.f32 %v117, 0.5
    %v121 = vmul.f32 %v114, 0.70710677
    %v122 = vmul.f32 %v117, 0.70710677
    %v123 = vmul.f32 %v121, %v121
    %v124 = vmin.f32 16.0, %v123
    %v125 = vmul.f32 %v124, 2.1237322e-06
    %v126 = vadd.f32 %v125, 0.00028619796
    %v127 = vmul.f32 %v124, %v126
    %v128 = vadd.f32 %v127, 0.0036580483
    %v129 = vmul.f32 %v124, %v128
    %v130 = vadd.f32 %v129, 0.05243302
    %v131 = vmul.f32 %v124, %v130
    %v132 = vadd.f32 %v131, 0.18741608
    %v133 = vmul.f32 %v124, %v132
    %v134 = vadd.f32 %v133, 1.1283791
    %v135 = vmul.f32 %v121, %v134
    %v136 = vmul.f32 %v124, 3.8918573e-05
    %v137 = vadd.f32 %v136, 0.001143296
    %v138 = vmul.f32 %v124, %v137
    %v139 = vadd.f32 %v138, 0.014752088
    %v140 = vmul.f32 %v124, %v139
    %v141 = vadd.f32 %v140, 0.112945676
    %v142 = vmul.f32 %v124, %v141
    %v143 = vadd.f32 %v142, 0.4994258
    %v144 = vmul.f32 %v124, %v143
    %v145 = vadd.f32 %v144, 1.0
    %v146 = vrcp.pop %v145
    %v147 = vmul.f32 %v145, %v146
    %v148 = vsub.f32 1.0, %v147
    %v149 = vmul.f32 %v146, %v148
    %v150 = vadd.f32 %v146, %v149
    %vm151 = vweird.f32 %v145
    %vm152 = vweird.f32 %v146
    %vm153 = vmor %vm151, %vm152
    %v154 = vsel %vm153, %v146, %v150
    %v155 = vand.u32 2147483647, %v145
    %vm156 = vcmp.eq.f32.partialorder %v155, 8.507059e+37
    %v157 = vand.u32 %v145, 2147483648
    %v158 = vor.u32 1.1754944e-38, %v157
    %v159 = vsel %vm156, %v158, %v154
    %v160 = vmul.f32 %v135, %v159
    %v161 = vmin.f32 %v160, 1.0
    %v162 = vmax.f32 %v161, -1.0
    %v163 = vmul.f32 %v122, %v122
    %v164 = vmin.f32 16.0, %v163
    %v165 = vmul.f32 %v164, 2.1237322e-06
    %v166 = vadd.f32 %v165, 0.00028619796
    %v167 = vmul.f32 %v164, %v166
    %v168 = vadd.f32 %v167, 0.0036580483
    %v169 = vmul.f32 %v164, %v168
    %v170 = vadd.f32 %v169, 0.05243302
    %v171 = vmul.f32 %v164, %v170
    %v172 = vadd.f32 %v171, 0.18741608
    %v173 = vmul.f32 %v164, %v172
    %v174 = vadd.f32 %v173, 1.1283791
    %v175 = vmul.f32 %v122, %v174
    %v176 = vmul.f32 %v164, 3.8918573e-05
    %v177 = vadd.f32 %v176, 0.001143296
    %v178 = vmul.f32 %v164, %v177
    %v179 = vadd.f32 %v178, 0.014752088
    %v180 = vmul.f32 %v164, %v179
    %v181 = vadd.f32 %v180, 0.112945676
    %v182 = vmul.f32 %v164, %v181
    %v183 = vadd.f32 %v182, 0.4994258
    %v184 = vmul.f32 %v164, %v183
    %v185 = vadd.f32 %v184, 1.0
    %v186 = vrcp.pop %v185
    %v187 = vmul.f32 %v185, %v186
    %v188 = vsub.f32 1.0, %v187
    %v189 = vmul.f32 %v186, %v188
    %v190 = vadd.f32 %v186, %v189
    %vm191 = vweird.f32 %v185
    %vm192 = vweird.f32 %v186
    %vm193 = vmor %vm191, %vm192
    %v194 = vsel %vm193, %v186, %v190
    %v195 = vand.u32 2147483647, %v185
    %vm196 = vcmp.eq.f32.partialorder %v195, 8.507059e+37
    %v197 = vand.u32 %v185, 2147483648
    %v198 = vor.u32 1.1754944e-38, %v197
    %v199 = vsel %vm196, %v198, %v194
    %v200 = vmul.f32 %v175, %v199
    %v201 = vmin.f32 %v200, 1.0
    %v202 = vmax.f32 %v201, -1.0
    %v203 = vadd.f32 %v162, 1.0
    %v204 = vadd.f32 %v202, 1.0
    %v205 = vmul.f32 %v119, %v203
    %v206 = vmul.f32 %v120, %v204
    %v207 = vld [vmem:[#allocation2] sm:$0xff]
    %v208 = vld [vmem:[#allocation2 + $0x8] sm:$0xff]
    %v209 = vld [vmem:[#allocation8] sm:$0xff]
    %v210 = vld [vmem:[#allocation8 + $0x8] sm:$0xff]
    %v211 = vld [vmem:[#allocation8 + $0x10] sm:$0xff]
    %v212 = vld [vmem:[#allocation8 + $0x18] sm:$0xff]
    %v213 = vld [vmem:[#allocation8 + $0x20] sm:$0xff]
    %v214 = vld [vmem:[#allocation8 + $0x28] sm:$0xff]
    %v215 = vld [vmem:[#allocation8 + $0x30] sm:$0xff]
    %v216 = vld [vmem:[#allocation8 + $0x38] sm:$0xff]
    %v217 = vld [vmem:[#allocation8 + $0x40] sm:$0xff]
    %v218 = vld [vmem:[#allocation8 + $0x48] sm:$0xff]
    %v219 = vld [vmem:[#allocation8 + $0x50] sm:$0xff]
    %v220 = vld [vmem:[#allocation8 + $0x58] sm:$0xff]
    %v221 = vld [vmem:[#allocation8 + $0x60] sm:$0xff]
    %v222 = vld [vmem:[#allocation8 + $0x68] sm:$0xff]
    %v223 = vld [vmem:[#allocation8 + $0x70] sm:$0xff]
    %v224 = vld [vmem:[#allocation8 + $0x78] sm:$0xff]
    %225 = vmatpush.msra.mxu0 %v224
    %226 = vmatpush.msra.mxu0 %v223
    %227 = vmatpush.msra.mxu0 %v222
    %228 = vmatpush.msra.mxu0 %v221
    %229 = vmatpush.msra.mxu0 %v220
    %230 = vmatpush.msra.mxu0 %v219
    %231 = vmatpush.msra.mxu0 %v218
    %232 = vmatpush.msra.mxu0 %v217
    %233 = vmatpush.msra.mxu0 %v216
    %234 = vmatpush.msra.mxu0 %v215
    %235 = vmatpush.msra.mxu0 %v214
    %236 = vmatpush.msra.mxu0 %v213
    %237 = vmatpush.msra.mxu0 %v212
    %238 = vmatpush.msra.mxu0 %v211
    %239 = vmatpush.msra.mxu0 %v210
    %240 = vmatpush.msra.mxu0 %v209
    %241 = vmatmul.f32.gmra.mxu0 %v205
    %v242 = vpop.f32.mrf.mxu0
    %v243 = vadd.f32 0.0, %v242
    %244 = vmatmul.f32.gmra.mxu0 %v206
    %v245 = vpop.f32.mrf.mxu0
    %v246 = vadd.f32 0.0, %v245
    %247 = vdwg.mxu0
    %v248 = vadd.f32 %v207, %v243
    %v249 = vadd.f32 %v208, %v246
    %250 = vst [vmem:[#allocation2] sm:$0xff] %v248
    %251 = vst [vmem:[#allocation2 + $0x8] sm:$0xff] %v249
    // Predicated region
    $region38: #{tpu_custom_call.1} parent=1 // pred_check
      %p252 = pneg %p68
    $region39: #{tpu_custom_call.1} parent=1 // pred_check_branch
      %254 = sbr.rel (%p252) target = $region41
    $region40: #{tpu_custom_call.1} parent=1 // pred_region
      %v255 = vld [vmem:[#allocation2] sm:$0xff]
      %v256 = vld [vmem:[#allocation2 + $0x8] sm:$0xff]
      %v257 = vld [vmem:[%s4] sm:$0x1]
      %v259 = vperm.slane %v257, 0
      %v261 = vadd.f32 %v255, %v259
      %v262 = vadd.f32 %v256, %v259
      %263 = vst [vmem:[#allocation9] sm:$0xff] %v261
      %264 = vst [vmem:[#allocation9 + $0x8] sm:$0xff] %v262
    $region41: #{tpu_custom_call.1} parent=1 // pred_fallthru
      _
    // Predicated region
    $region42: #{tpu_custom_call.1} parent=1 // pred_check
      _
    $region43: #{tpu_custom_call.1} parent=1 // pred_check_branch
      %266 = sbr.rel (0) target = $region45
    $region44: #{tpu_custom_call.1} parent=1 // pred_region
      %268 = vsyncadd [#allocation5], 0
      %s269 = sshll.u32 [#allocation9], 4
      %s270 = int_to_ptr.vmem [resolvable:$true] %s269
      %s271 = sshll.u32 %s5, 4
      %s272 = int_to_ptr.hbm [resolvable:$true] %s271
      %277 = dma.vmem_to_hbm [thread:$0]  %s270, 256, %s272, [#allocation5], 128, 128, 8
    $region45: #{tpu_custom_call.1} parent=1 // pred_fallthru
      _
    // Predicated region
    $region46: #{tpu_custom_call.1} parent=1 // pred_check
      _
    $region47: #{tpu_custom_call.1} parent=1 // pred_check_branch
      %279 = sbr.rel (0) target = $region49
    $region48: #{tpu_custom_call.1} parent=1 // pred_region
      %281 = dma.done [#allocation5], 256
    $region49: #{tpu_custom_call.1} parent=1 // pred_fallthru
      _
    %282 = vsyncpa [#allocation4], 1
    %283 = vsyncpa [#allocation7], 1
    %284 = vsyncpa [#allocation5], 1

// kernel: tpu_custom_call.1
$region0: #{tpu_custom_call.1}
  #allocation0 [shape = 'u32[]', space=smem, size = 0x4, offset = 0x4, fixed_abs, tag = 'smem constant byte address 0x4 - core index']
  #allocation1 [shape = 'u32[72,128]{1,0:T(1,128)}', space=vmem, size = 0x9000, scoped, tag = 'internal scratch']
  #allocation2 [shape = 'f32[16,128]{1,0:T(8,128)}', space=vmem, size = 0x2000, scoped, tag = 'scratch operand']
  %s0 = inlined_call_operand.hbm [shape: f32[16,128], index: 0, kind: input, shape index: {}]
  %s1 = inlined_call_operand.hbm [shape: f32[128,128], index: 1, kind: input, shape index: {}]
  %s2 = inlined_call_operand.vmem [shape: f32[1,128], index: 2, kind: input, shape index: {}]
  %s3 = inlined_call_operand.hbm [shape: f32[128,128], index: 3, kind: input, shape index: {}]
  %s4 = inlined_call_operand.vmem [shape: f32[1,128], index: 4, kind: input, shape index: {}]
  %s5 = inlined_call_operand.hbm [shape: f32[16,128], index: 5, kind: output, shape index: {}]
  %s6 = sld [smem:[#allocation0]]
  $region50: #{tpu_custom_call.1} parent=0
    _
  %s8 = ssub.s32 1, %s6
  %s9 = scalar_select 0, %s8, %s6
  $region1: #{tpu_custom_call.1} parent=0
    #allocation3 [shape = 'u8[8192]{0}', space=vmem, size = 0x2000, scoped, tag = 'input window, operand 0, single buffered']
    #allocation4 [shape = 's32[1]{0}', space=sflag, size = 0x4, scoped, tag = 'scoped memory for tpu_custom_call.1']
    #allocation5 [shape = 's32[1]{0}', space=sflag, size = 0x4, scoped, tag = 'scoped memory for tpu_custom_call.1']
    #allocation6 [shape = 'u8[65536]{0}', space=vmem, size = 0x10000, scoped, tag = 'input window, operand 1, single buffered']
    #allocation7 [shape = 's32[1]{0}', space=sflag, size = 0x4, scoped, tag = 'scoped memory for tpu_custom_call.1']
    #allocation8 [shape = 'u8[65536]{0}', space=vmem, size = 0x10000, scoped, tag = 'input window, operand 3, single buffered']
    #allocation9 [shape = 'u8[8192]{0}', space=vmem, size = 0x2000, scoped, tag = 'output window, operand 0, single buffered']
    %10 = vsyncpa [#allocation4], 0
    %11 = vsyncpa [#allocation7], 0
    %12 = vsyncpa [#allocation5], 0
    // Predicated region
    $region2: #{tpu_custom_call.1} parent=1 // pred_check
      _
    $region3: #{tpu_custom_call.1} parent=1 // pred_check_branch
      %14 = sbr.rel (0) target = $region5
    $region4: #{tpu_custom_call.1} parent=1 // pred_region
      %16 = vsyncadd [#allocation4], 0
      %s17 = sshll.u32 %s0, 4
      %s18 = int_to_ptr.hbm [resolvable:$true] %s17
      %s19 = sshll.u32 [#allocation3], 4
      %s20 = int_to_ptr.vmem [resolvable:$true] %s19
      %25 = dma.hbm_to_vmem [thread:$0]  %s18, 256, %s20, [#allocation4], 128, 128, 8
    $region5: #{tpu_custom_call.1} parent=1 // pred_fallthru
      _
    // Predicated region
    $region6: #{tpu_custom_call.1} parent=1 // pred_check
      _
    $region7: #{tpu_custom_call.1} parent=1 // pred_check_branch
      %27 = sbr.rel (0) target = $region9
    $region8: #{tpu_custom_call.1} parent=1 // pred_region
      %29 = vsyncadd [#allocation7], 0
      %s30 = sshll.u32 %s1, 4
      %s31 = int_to_ptr.hbm [resolvable:$true] %s30
      %s32 = sshll.u32 [#allocation6], 4
      %s33 = int_to_ptr.vmem [resolvable:$true] %s32
      %38 = dma.hbm_to_vmem [thread:$0]  %s31, 2048, %s33, [#allocation7], 128, 128, 8
    $region9: #{tpu_custom_call.1} parent=1 // pred_fallthru
      _
    // Predicated region
    $region10: #{tpu_custom_call.1} parent=1 // pred_check
      _
    $region11: #{tpu_custom_call.1} parent=1 // pred_check_branch
      %40 = sbr.rel (0) target = $region13
    $region12: #{tpu_custom_call.1} parent=1 // pred_region
      _
    $region13: #{tpu_custom_call.1} parent=1 // pred_fallthru
      _
    // Predicated region
    $region14: #{tpu_custom_call.1} parent=1 // pred_check
      _
    $region15: #{tpu_custom_call.1} parent=1 // pred_check_branch
      %42 = sbr.rel (0) target = $region17
    $region16: #{tpu_custom_call.1} parent=1 // pred_region
      %44 = vsyncadd [#allocation7], 0
      %s45 = sshll.u32 %s3, 4
      %s46 = int_to_ptr.hbm [resolvable:$true] %s45
      %s47 = sshll.u32 [#allocation8], 4
      %s48 = int_to_ptr.vmem [resolvable:$true] %s47
      %53 = dma.hbm_to_vmem [thread:$0]  %s46, 2048, %s48, [#allocation7], 128, 128, 8
    $region17: #{tpu_custom_call.1} parent=1 // pred_fallthru
      _
    // Predicated region
    $region18: #{tpu_custom_call.1} parent=1 // pred_check
      _
    $region19: #{tpu_custom_call.1} parent=1 // pred_check_branch
      %55 = sbr.rel (0) target = $region21
    $region20: #{tpu_custom_call.1} parent=1 // pred_region
      _
    $region21: #{tpu_custom_call.1} parent=1 // pred_fallthru
      _
    // Predicated region
    $region22: #{tpu_custom_call.1} parent=1 // pred_check
      _
    $region23: #{tpu_custom_call.1} parent=1 // pred_check_branch
      %57 = sbr.rel (0) target = $region25
    $region24: #{tpu_custom_call.1} parent=1 // pred_region
      %59 = dma.done [#allocation4], 256
    $region25: #{tpu_custom_call.1} parent=1 // pred_fallthru
      _
    // Predicated region
    $region26: #{tpu_custom_call.1} parent=1 // pred_check
      _
    $region27: #{tpu_custom_call.1} parent=1 // pred_check_branch
      %61 = sbr.rel (0) target = $region29
    $region28: #{tpu_custom_call.1} parent=1 // pred_region
      %63 = dma.done [#allocation7], 2048
    $region29: #{tpu_custom_call.1} parent=1 // pred_fallthru
      _
    // Predicated region
    $region30: #{tpu_custom_call.1} parent=1 // pred_check
      _
    $region31: #{tpu_custom_call.1} parent=1 // pred_check_branch
      %65 = sbr.rel (0) target = $region33
    $region32: #{tpu_custom_call.1} parent=1 // pred_region
      %67 = dma.done [#allocation7], 2048
    $region33: #{tpu_custom_call.1} parent=1 // pred_fallthru
      _
    %p68 = scmp.eq.s32.totalorder 0, 0
    // Predicated region
    $region34: #{tpu_custom_call.1} parent=1 // pred_check
      %p69 = pneg %p68
    $region35: #{tpu_custom_call.1} parent=1 // pred_check_branch
      %71 = sbr.rel (%p69) target = $region37
    $region36: #{tpu_custom_call.1} parent=1 // pred_region
      %72 = vst [vmem:[#allocation2] sm:$0xff] 0.0
      %73 = vst [vmem:[#allocation2 + $0x8] sm:$0xff] 0.0
    $region37: #{tpu_custom_call.1} parent=1 // pred_fallthru
      _
    %v74 = vld [vmem:[#allocation3] sm:$0xff]
    %v75 = vld [vmem:[#allocation3 + $0x8] sm:$0xff]
    %v76 = vld [vmem:[#allocation6] sm:$0xff]
    %v77 = vld [vmem:[#allocation6 + $0x8] sm:$0xff]
    %v78 = vld [vmem:[#allocation6 + $0x10] sm:$0xff]
    %v79 = vld [vmem:[#allocation6 + $0x18] sm:$0xff]
    %v80 = vld [vmem:[#allocation6 + $0x20] sm:$0xff]
    %v81 = vld [vmem:[#allocation6 + $0x28] sm:$0xff]
    %v82 = vld [vmem:[#allocation6 + $0x30] sm:$0xff]
    %v83 = vld [vmem:[#allocation6 + $0x38] sm:$0xff]
    %v84 = vld [vmem:[#allocation6 + $0x40] sm:$0xff]
    %v85 = vld [vmem:[#allocation6 + $0x48] sm:$0xff]
    %v86 = vld [vmem:[#allocation6 + $0x50] sm:$0xff]
    %v87 = vld [vmem:[#allocation6 + $0x58] sm:$0xff]
    %v88 = vld [vmem:[#allocation6 + $0x60] sm:$0xff]
    %v89 = vld [vmem:[#allocation6 + $0x68] sm:$0xff]
    %v90 = vld [vmem:[#allocation6 + $0x70] sm:$0xff]
    %v91 = vld [vmem:[#allocation6 + $0x78] sm:$0xff]
    %v92 = vld [vmem:[%s2] sm:$0x1]
    %v94 = vperm.slane %v92, 0
    %96 = vmatpush.msra.mxu0 %v91
    %97 = vmatpush.msra.mxu0 %v90
    %98 = vmatpush.msra.mxu0 %v89
    %99 = vmatpush.msra.mxu0 %v88
    %100 = vmatpush.msra.mxu0 %v87
    %101 = vmatpush.msra.mxu0 %v86
    %102 = vmatpush.msra.mxu0 %v85
    %103 = vmatpush.msra.mxu0 %v84
    %104 = vmatpush.msra.mxu0 %v83
    %105 = vmatpush.msra.mxu0 %v82
    %106 = vmatpush.msra.mxu0 %v81
    %107 = vmatpush.msra.mxu0 %v80
    %108 = vmatpush.msra.mxu0 %v79
    %109 = vmatpush.msra.mxu0 %v78
    %110 = vmatpush.msra.mxu0 %v77
    %111 = vmatpush.msra.mxu0 %v76
    %112 = vmatmul.f32.gmra.mxu0 %v74
    %v113 = vpop.f32.mrf.mxu0
    %v114 = vadd.f32 %v94, %v113
    %115 = vmatmul.f32.gmra.mxu0 %v75
    %v116 = vpop.f32.mrf.mxu0
    %v117 = vadd.f32 %v94, %v116
    %118 = vdwg.mxu0
    %v119 = vmul.f32 %v114, 0.5
    %v120 = vmul.f32 %v117, 0.5
    %v121 = vmul.f32 %v114, 0.70710677
    %v122 = vmul.f32 %v117, 0.70710677
    %v123 = vmul.f32 %v121, %v121
    %v124 = vmin.f32 16.0, %v123
    %v125 = vmul.f32 %v124, 2.1237322e-06
    %v126 = vadd.f32 %v125, 0.00028619796
    %v127 = vmul.f32 %v124, %v126
    %v128 = vadd.f32 %v127, 0.0036580483
    %v129 = vmul.f32 %v124, %v128
    %v130 = vadd.f32 %v129, 0.05243302
    %v131 = vmul.f32 %v124, %v130
    %v132 = vadd.f32 %v131, 0.18741608
    %v133 = vmul.f32 %v124, %v132
    %v134 = vadd.f32 %v133, 1.1283791
    %v135 = vmul.f32 %v121, %v134
    %v136 = vmul.f32 %v124, 3.8918573e-05
    %v137 = vadd.f32 %v136, 0.001143296
    %v138 = vmul.f32 %v124, %v137
    %v139 = vadd.f32 %v138, 0.014752088
    %v140 = vmul.f32 %v124, %v139
    %v141 = vadd.f32 %v140, 0.112945676
    %v142 = vmul.f32 %v124, %v141
    %v143 = vadd.f32 %v142, 0.4994258
    %v144 = vmul.f32 %v124, %v143
    %v145 = vadd.f32 %v144, 1.0
    %v146 = vrcp.pop %v145
    %v147 = vmul.f32 %v145, %v146
    %v148 = vsub.f32 1.0, %v147
    %v149 = vmul.f32 %v146, %v148
    %v150 = vadd.f32 %v146, %v149
    %vm151 = vweird.f32 %v145
    %vm152 = vweird.f32 %v146
    %vm153 = vmor %vm151, %vm152
    %v154 = vsel %vm153, %v146, %v150
    %v155 = vand.u32 2147483647, %v145
    %vm156 = vcmp.eq.f32.partialorder %v155, 8.507059e+37
    %v157 = vand.u32 %v145, 2147483648
    %v158 = vor.u32 1.1754944e-38, %v157
    %v159 = vsel %vm156, %v158, %v154
    %v160 = vmul.f32 %v135, %v159
    %v161 = vmin.f32 %v160, 1.0
    %v162 = vmax.f32 %v161, -1.0
    %v163 = vmul.f32 %v122, %v122
    %v164 = vmin.f32 16.0, %v163
    %v165 = vmul.f32 %v164, 2.1237322e-06
    %v166 = vadd.f32 %v165, 0.00028619796
    %v167 = vmul.f32 %v164, %v166
    %v168 = vadd.f32 %v167, 0.0036580483
    %v169 = vmul.f32 %v164, %v168
    %v170 = vadd.f32 %v169, 0.05243302
    %v171 = vmul.f32 %v164, %v170
    %v172 = vadd.f32 %v171, 0.18741608
    %v173 = vmul.f32 %v164, %v172
    %v174 = vadd.f32 %v173, 1.1283791
    %v175 = vmul.f32 %v122, %v174
    %v176 = vmul.f32 %v164, 3.8918573e-05
    %v177 = vadd.f32 %v176, 0.001143296
    %v178 = vmul.f32 %v164, %v177
    %v179 = vadd.f32 %v178, 0.014752088
    %v180 = vmul.f32 %v164, %v179
    %v181 = vadd.f32 %v180, 0.112945676
    %v182 = vmul.f32 %v164, %v181
    %v183 = vadd.f32 %v182, 0.4994258
    %v184 = vmul.f32 %v164, %v183
    %v185 = vadd.f32 %v184, 1.0
    %v186 = vrcp.pop %v185
    %v187 = vmul.f32 %v185, %v186
    %v188 = vsub.f32 1.0, %v187
    %v189 = vmul.f32 %v186, %v188
    %v190 = vadd.f32 %v186, %v189
    %vm191 = vweird.f32 %v185
    %vm192 = vweird.f32 %v186
    %vm193 = vmor %vm191, %vm192
    %v194 = vsel %vm193, %v186, %v190
    %v195 = vand.u32 2147483647, %v185
    %vm196 = vcmp.eq.f32.partialorder %v195, 8.507059e+37
    %v197 = vand.u32 %v185, 2147483648
    %v198 = vor.u32 1.1754944e-38, %v197
    %v199 = vsel %vm196, %v198, %v194
    %v200 = vmul.f32 %v175, %v199
    %v201 = vmin.f32 %v200, 1.0
    %v202 = vmax.f32 %v201, -1.0
    %v203 = vadd.f32 %v162, 1.0
    %v204 = vadd.f32 %v202, 1.0
    %v205 = vmul.f32 %v119, %v203
    %v206 = vmul.f32 %v120, %v204
    %v207 = vld [vmem:[#allocation2] sm:$0xff]
    %v208 = vld [vmem:[#allocation2 + $0x8] sm:$0xff]
    %v209 = vld [vmem:[#allocation8] sm:$0xff]
    %v210 = vld [vmem:[#allocation8 + $0x8] sm:$0xff]
    %v211 = vld [vmem:[#allocation8 + $0x10] sm:$0xff]
    %v212 = vld [vmem:[#allocation8 + $0x18] sm:$0xff]
    %v213 = vld [vmem:[#allocation8 + $0x20] sm:$0xff]
    %v214 = vld [vmem:[#allocation8 + $0x28] sm:$0xff]
    %v215 = vld [vmem:[#allocation8 + $0x30] sm:$0xff]
    %v216 = vld [vmem:[#allocation8 + $0x38] sm:$0xff]
    %v217 = vld [vmem:[#allocation8 + $0x40] sm:$0xff]
    %v218 = vld [vmem:[#allocation8 + $0x48] sm:$0xff]
    %v219 = vld [vmem:[#allocation8 + $0x50] sm:$0xff]
    %v220 = vld [vmem:[#allocation8 + $0x58] sm:$0xff]
    %v221 = vld [vmem:[#allocation8 + $0x60] sm:$0xff]
    %v222 = vld [vmem:[#allocation8 + $0x68] sm:$0xff]
    %v223 = vld [vmem:[#allocation8 + $0x70] sm:$0xff]
    %v224 = vld [vmem:[#allocation8 + $0x78] sm:$0xff]
    %225 = vmatpush.msra.mxu0 %v224
    %226 = vmatpush.msra.mxu0 %v223
    %227 = vmatpush.msra.mxu0 %v222
    %228 = vmatpush.msra.mxu0 %v221
    %229 = vmatpush.msra.mxu0 %v220
    %230 = vmatpush.msra.mxu0 %v219
    %231 = vmatpush.msra.mxu0 %v218
    %232 = vmatpush.msra.mxu0 %v217
    %233 = vmatpush.msra.mxu0 %v216
    %234 = vmatpush.msra.mxu0 %v215
    %235 = vmatpush.msra.mxu0 %v214
    %236 = vmatpush.msra.mxu0 %v213
    %237 = vmatpush.msra.mxu0 %v212
    %238 = vmatpush.msra.mxu0 %v211
    %239 = vmatpush.msra.mxu0 %v210
    %240 = vmatpush.msra.mxu0 %v209
    %241 = vmatmul.f32.gmra.mxu0 %v205
    %v242 = vpop.f32.mrf.mxu0
    %v243 = vadd.f32 0.0, %v242
    %244 = vmatmul.f32.gmra.mxu0 %v206
    %v245 = vpop.f32.mrf.mxu0
    %v246 = vadd.f32 0.0, %v245
    %247 = vdwg.mxu0
    %v248 = vadd.f32 %v207, %v243
    %v249 = vadd.f32 %v208, %v246
    %250 = vst [vmem:[#allocation2] sm:$0xff] %v248
    %251 = vst [vmem:[#allocation2 + $0x8] sm:$0xff] %v249
    // Predicated region
    $region38: #{tpu_custom_call.1} parent=1 // pred_check
      %p252 = pneg %p68
    $region39: #{tpu_custom_call.1} parent=1 // pred_check_branch
      %254 = sbr.rel (%p252) target = $region41
    $region40: #{tpu_custom_call.1} parent=1 // pred_region
      %v255 = vld [vmem:[#allocation2] sm:$0xff]
      %v256 = vld [vmem:[#allocation2 + $0x8] sm:$0xff]
      %v257 = vld [vmem:[%s4] sm:$0x1]
      %v259 = vperm.slane %v257, 0
      %v261 = vadd.f32 %v255, %v259
      %v262 = vadd.f32 %v256, %v259
      %263 = vst [vmem:[#allocation9] sm:$0xff] %v261
      %264 = vst [vmem:[#allocation9 + $0x8] sm:$0xff] %v262
    $region41: #{tpu_custom_call.1} parent=1 // pred_fallthru
      _
    // Predicated region
    $region42: #{tpu_custom_call.1} parent=1 // pred_check
      _
    $region43: #{tpu_custom_call.1} parent=1 // pred_check_branch
      %266 = sbr.rel (0) target = $region45
    $region44: #{tpu_custom_call.1} parent=1 // pred_region
      %268 = vsyncadd [#allocation5], 0
      %s269 = sshll.u32 [#allocation9], 4
      %s270 = int_to_ptr.vmem [resolvable:$true] %s269
      %s271 = sshll.u32 %s5, 4
      %s272 = int_to_ptr.hbm [resolvable:$true] %s271
      %277 = dma.vmem_to_hbm [thread:$0]  %s270, 256, %s272, [#allocation5], 128, 128, 8
    $region45: #{tpu_custom_call.1} parent=1 // pred_fallthru
      _
    // Predicated region
    $region46: #{tpu_custom_call.1} parent=1 // pred_check
      _
    $region47: #{tpu_custom_call.1} parent=1 // pred_check_branch
      %279 = sbr.rel (0) target = $region49
    $region48: #{tpu_custom_call.1} parent=1 // pred_region
      %281 = dma.done [#allocation5], 256
    $region49: #{tpu_custom_call.1} parent=1 // pred_fallthru
      _
    %282 = vsyncpa [#allocation4], 1
    %283 = vsyncpa [#allocation7], 1
    %284 = vsyncpa [#allocation5], 1

</llo_original>
